<compile_context>
chip_gen: v7x
topology: tpu7x:2x2x1
jax: 0.10.0
libtpu: 0.0.40
codegen_flags: <defaults>
</compile_context>

<pallas_src>
import functools
import math

import jax
import jax.numpy as jnp
from jax import lax
from jax.experimental import pallas as pl
from jax.experimental.pallas import tpu as pltpu


def _encoder_kernel(x_ref, wq_ref, wk_ref, wv_ref, wp_ref,
                    w1_ref, b1_ref, w2_ref, b2_ref, o_ref, *, n_seq):
    """One grid step = one (batch-chunk, layer) pair.

    x_ref  : (R, D) f32   input rows for this chunk (R = batch_block * N)
    w*_ref : (1, ...)     this layer's weights (bf16 in the production path)
    b*_ref : (1, 1, ...)  f32 biases
    o_ref  : (R, D) f32   output block; ALSO the VMEM-resident activation carrier
                          across the layer axis (constant block index over layers).

    The layer axis must stay the LAST grid axis and "arbitrary"; reordering the
    grid or marking it parallel silently breaks the layer-to-layer carry.
    """
    layer = pl.program_id(1)

    # Layer 0 of this chunk: seed the activation carrier from the input tile.
    @pl.when(layer == 0)
    def _():
        o_ref[...] = x_ref[...]

    x2d = o_ref[...]                                    # (R, D) f32 activation
    R, D = x2d.shape
    bb = R // n_seq                                     # batch elems in this chunk

    cdt = wq_ref.dtype                                  # MXU operand dtype (bf16 prod / f32 check)
    xc = x2d.astype(cdt)

    # ---- Multi-head attention (num_heads = 1): separate q/k/v projections ----
    # (separate dots, not a merged Wqkv + slices: avoids lane-misaligned slices)
    q = jnp.dot(xc, wq_ref[0], preferred_element_type=jnp.float32)   # (R, K); 1/sqrt(K) folded in
    k = jnp.dot(xc, wk_ref[0], preferred_element_type=jnp.float32)   # (R, K)
    v = jnp.dot(xc, wv_ref[0], preferred_element_type=jnp.float32)   # (R, D)
    K = q.shape[1]

    q3 = q.reshape(bb, n_seq, K).astype(cdt)
    k3 = k.reshape(bb, n_seq, K).astype(cdt)
    v3 = v.reshape(bb, n_seq, D).astype(cdt)

    # scores: contract on K for both operands (no k.T / XLU transpose)
    s = lax.dot_general(q3, k3, (((2,), (2,)), ((0,), (0,))),
                        preferred_element_type=jnp.float32)          # (bb, N, N)

    # softmax over keys -- exact f32 normalization (approx reciprocal removed)
    m = jnp.max(s, axis=-1, keepdims=True)
    e = jnp.exp(s - m)
    p = e / jnp.sum(e, axis=-1, keepdims=True)

    attn = lax.dot_general(p.astype(cdt), v3, (((2,), (1,)), ((0,), (0,))),
                           preferred_element_type=jnp.float32)       # (bb, N, D)

    y1 = x2d + jnp.dot(attn.reshape(R, D).astype(cdt), wp_ref[0],
                       preferred_element_type=jnp.float32)           # residual, f32

    # ---- FeedForward (+ residual); biases and elementwise math stay f32 ----
    h = jnp.maximum(
        jnp.dot(y1.astype(cdt), w1_ref[0], preferred_element_type=jnp.float32)
        + b1_ref[0], 0.0)
    y2 = y1 + jnp.dot(h.astype(cdt), w2_ref[0],
                      preferred_element_type=jnp.float32) + b2_ref[0]

    # Carry / emit: o_ref is only written back to HBM once the chunk changes,
    # i.e. after the last layer of this chunk.
    o_ref[...] = y2


def prepare_stacked_params(layer_params, *, d_key, param_dtype=jnp.bfloat16):
    """Stack per-layer weights (leading layer axis), fold 1/sqrt(d_key) into Wq,
    and cast the matmul weights to `param_dtype` (bf16 => MXU-native throughput
    and half the weight DMA). Biases stay f32 (VPU adds, accuracy for free)."""
    scale = 1.0 / math.sqrt(d_key)
    st = lambda name: jnp.stack([p[name] for p in layer_params])
    return {
        "wq": (st("wq") * scale).astype(param_dtype),   # (L, D, K)
        "wk": st("wk").astype(param_dtype),             # (L, D, K)
        "wv": st("wv").astype(param_dtype),             # (L, D, D)
        "wp": st("wp").astype(param_dtype),             # (L, D, D)
        "w1": st("w1").astype(param_dtype),             # (L, D, inner)
        "w2": st("w2").astype(param_dtype),             # (L, inner, D)
        "b1": st("b1").astype(jnp.float32),             # (L, 1, inner)
        "b2": st("b2").astype(jnp.float32),             # (L, 1, D)
    }


def encoder_forward(x, stacked, *, batch_block=None):
    """x: (B, N, D) float32. stacked: output of prepare_stacked_params.

    batch_block: batch elements per grid chunk. Default = whole batch (one chunk
    => every layer's weights DMA'd exactly once, fewest grid steps). On v7x only
    split into 2 "parallel" chunks (batch_block = B//2) when the kernel is
    compute-bound; when weight-DMA-bound the split doubles HBM weight traffic.
    """
    B, N, D = x.shape
    L, _, K = stacked["wq"].shape
    inner = stacked["w1"].shape[2]
    if batch_block is None:
        batch_block = B
    assert B % batch_block == 0
    num_chunks = B // batch_block
    R = batch_block * N                      # rows per chunk (sublane-folded B*N)

    x2d = x.reshape(B * N, D).astype(jnp.float32)   # lane-dense 2-D slab

    # --- explicit VMEM budget: double-buffered weight + activation blocks, 2x headroom ---
    wbytes = jnp.dtype(stacked["wq"].dtype).itemsize
    per_layer_w = wbytes * (2 * D * K + 2 * D * D + 2 * D * inner) + 4 * (inner + D)
    act_bytes = R * D * 4
    interm_bytes = 4 * (R * (2 * K + 2 * D + inner) + 2 * batch_block * N * N)
    vmem_bytes = 2 * (2 * per_layer_w + 2 * 2 * act_bytes + interm_bytes)
    vmem_bytes = int(min(max(vmem_bytes, 16 * 1024 * 1024), 64 * 1024 * 1024))

    # --- advisory cost estimate so XLA schedules around the long fused call ---
    flops = int(L * (2 * B * N * (2 * D * K + 2 * D * D + 2 * D * inner)
                     + 2 * B * N * N * (K + D)))
    cost = pl.CostEstimate(
        flops=flops,
        transcendentals=int(L * B * N * N),
        bytes_accessed=int(num_chunks * L * per_layer_w + 2 * B * N * D * 4))

    kernel = functools.partial(_encoder_kernel, n_seq=N)

    out2d = pl.pallas_call(
        kernel,
        out_shape=jax.ShapeDtypeStruct((B * N, D), jnp.float32),
        grid=(num_chunks, L),                # layer axis LAST (sequential carry)
        in_specs=[
            # activation chunk: block index constant across layers -> fetched once/chunk
            pl.BlockSpec((R, D), lambda c, l: (c, 0)),
            # per-layer weights: stream one layer per step
            pl.BlockSpec((1, D, K),     lambda c, l: (l, 0, 0)),  # Wq (pre-scaled)
            pl.BlockSpec((1, D, K),     lambda c, l: (l, 0, 0)),  # Wk
            pl.BlockSpec((1, D, D),     lambda c, l: (l, 0, 0)),  # Wv
            pl.BlockSpec((1, D, D),     lambda c, l: (l, 0, 0)),  # Wp
            pl.BlockSpec((1, D, inner), lambda c, l: (l, 0, 0)),  # W1
            pl.BlockSpec((1, 1, inner), lambda c, l: (l, 0, 0)),  # b1
            pl.BlockSpec((1, inner, D), lambda c, l: (l, 0, 0)),  # W2
            pl.BlockSpec((1, 1, D),     lambda c, l: (l, 0, 0)),  # b2
        ],
        out_specs=pl.BlockSpec((R, D), lambda c, l: (c, 0)),
        compiler_params=pltpu.CompilerParams(
            dimension_semantics=("parallel", "arbitrary"),
            vmem_limit_bytes=vmem_bytes),
        cost_estimate=cost,
    )(x2d, stacked["wq"], stacked["wk"], stacked["wv"], stacked["wp"],
      stacked["w1"], stacked["b1"], stacked["w2"], stacked["b2"])
    return out2d.reshape(B, N, D)


def _reference_layer(x, p, d_key):
    """Pure-JAX high-precision reference (same math as the PyTorch layer, H=1)."""
    hp = lax.Precision.HIGHEST
    scale = 1.0 / math.sqrt(d_key)
    q = jnp.einsum("bnd,dk->bnk", x, p["wq"], precision=hp)
    k = jnp.einsum("bnd,dk->bnk", x, p["wk"], precision=hp)
    v = jnp.einsum("bnd,de->bne", x, p["wv"], precision=hp)
    s = jnp.einsum("bnk,bmk->bnm", q, k, precision=hp) * scale
    a = jax.nn.softmax(s, axis=-1)
    attn = jnp.einsum("bnm,bmd->bnd", a, v, precision=hp)
    y1 = x + jnp.einsum("bnd,de->bne", attn, p["wp"], precision=hp)
    h = jnp.maximum(jnp.einsum("bnd,di->bni", y1, p["w1"], precision=hp)
                    + p["b1"][0], 0.0)
    return y1 + jnp.einsum("bni,id->bnd", h, p["w2"], precision=hp) + p["b2"][0]


def make_layer_params(key, d_model, d_key, inner_dim):
    ks = jax.random.split(key, 8)
    init = lambda k, shape, fan_in: (jax.random.normal(k, shape, jnp.float32)
                                     / math.sqrt(fan_in))
    return {
        "wq": init(ks[0], (d_model, d_key), d_model),
        "wk": init(ks[1], (d_model, d_key), d_model),
        "wv": init(ks[2], (d_model, d_model), d_model),
        "wp": init(ks[3], (d_model, d_model), d_model),
        "w1": init(ks[4], (d_model, inner_dim), d_model),
        "b1": init(ks[5], (1, inner_dim), 1),
        "w2": init(ks[6], (inner_dim, d_model), inner_dim),
        "b2": init(ks[7], (1, d_model), 1),
    }


if __name__ == "__main__":
    # Encoder(d_key=16, d_value=32, num_layers=2) with num_heads=1  =>  d_model = 32
    B, N = 2, 8
    d_key, d_value, num_layers = 16, 32, 2
    d_model = d_value            # d_value * num_heads, num_heads = 1
    inner_dim = d_value          # FeedForward(d_model, inner_dim=d_value)

    root = jax.random.PRNGKey(0)
    kx, kp = jax.random.split(root)
    x = jax.random.normal(kx, (B, N, d_model), jnp.float32)

    layer_params = [make_layer_params(k, d_model, d_key, inner_dim)
                    for k in jax.random.split(kp, num_layers)]

    # plain-JAX high-precision reference
    ref = x
    for p in layer_params:
        ref = _reference_layer(ref, p, d_key)

    # (1) Production path: bf16 MXU operands, f32 accumulate/softmax/residual.
    #     Tolerance sized for bf16 operand rounding across 2 layers.
    stacked_bf16 = prepare_stacked_params(layer_params, d_key=d_key,
                                          param_dtype=jnp.bfloat16)
    out_bf16 = jax.block_until_ready(encoder_forward(x, stacked_bf16))
    assert out_bf16.shape == x.shape
    assert jnp.allclose(out_bf16, ref, atol=1e-1, rtol=5e-2), \
        "mismatch vs reference (bf16 path)"

    # (2) f32-weight path, chunked batch axis (exercises the 'parallel' chunk
    #     grid / multi-chunk carry). Tighter tolerance.
    stacked_f32 = prepare_stacked_params(layer_params, d_key=d_key,
                                         param_dtype=jnp.float32)
    out_f32 = jax.block_until_ready(
        encoder_forward(x, stacked_f32, batch_block=1))
    assert jnp.allclose(out_f32, ref, atol=2e-2, rtol=2e-2), \
        "mismatch vs reference (f32 path)"

    print("KERNEL_OK")
</pallas_src>

<mosaic_0001>
module attributes {stable_mosaic.version = 11 : i64} {
  func.func @_encoder_kernel(%arg0: i32, %arg1: i32, %arg2: memref<16x32xf32, #tpu.memory_space<vmem>>, %arg3: memref<1x32x16xbf16, #tpu.memory_space<vmem>>, %arg4: memref<1x32x16xbf16, #tpu.memory_space<vmem>>, %arg5: memref<1x32x32xbf16, #tpu.memory_space<vmem>>, %arg6: memref<1x32x32xbf16, #tpu.memory_space<vmem>>, %arg7: memref<1x32x32xbf16, #tpu.memory_space<vmem>>, %arg8: memref<1x1x32xf32, #tpu.memory_space<vmem>>, %arg9: memref<1x32x32xbf16, #tpu.memory_space<vmem>>, %arg10: memref<1x1x32xf32, #tpu.memory_space<vmem>>, %arg11: memref<16x32xf32, #tpu.memory_space<vmem>>) attributes {dimension_semantics = [#tpu.dimension_semantics<parallel>, #tpu.dimension_semantics<arbitrary>], iteration_bounds = array<i64: 1, 2>, scalar_prefetch = 0 : i64, scratch_operands = 0 : i64, tpu.core_type = #tpu.core_type<tc>, window_params = [{transform_indices = @transform_0, window_bounds = array<i64: 16, 32>}, {transform_indices = @transform_1, window_bounds = array<i64: 1, 32, 16>}, {transform_indices = @transform_2, window_bounds = array<i64: 1, 32, 16>}, {transform_indices = @transform_3, window_bounds = array<i64: 1, 32, 32>}, {transform_indices = @transform_4, window_bounds = array<i64: 1, 32, 32>}, {transform_indices = @transform_5, window_bounds = array<i64: 1, 32, 32>}, {transform_indices = @transform_6, window_bounds = array<i64: 1, 1, 32>}, {transform_indices = @transform_7, window_bounds = array<i64: 1, 32, 32>}, {transform_indices = @transform_8, window_bounds = array<i64: 1, 1, 32>}, {transform_indices = @transform_9, window_bounds = array<i64: 16, 32>}]} {
    %c0_i32 = arith.constant 0 : i32
    %0 = arith.cmpi eq, %arg1, %c0_i32 : i32
    %1 = arith.extui %0 : i1 to i32
    %c0_i32_0 = arith.constant 0 : i32
    %2 = arith.cmpi ne, %1, %c0_i32_0 : i32
    scf.if %2 {
      %c0_38 = arith.constant 0 : index
      %c0_39 = arith.constant 0 : index
      %58 = vector.load %arg2[%c0_38, %c0_39] : memref<16x32xf32, #tpu.memory_space<vmem>>, vector<16x32xf32>
      %c0_40 = arith.constant 0 : index
      %c0_41 = arith.constant 0 : index
      %59 = vector.load %arg11[%c0_40, %c0_41] : memref<16x32xf32, #tpu.memory_space<vmem>>, vector<16x32xf32>
      tpu.vector_store %arg11[%c0_40, %c0_41], %58 {strides = array<i32>} : memref<16x32xf32, #tpu.memory_space<vmem>>, vector<16x32xf32>,
    } else {
    }
    %c0 = arith.constant 0 : index
    %c0_1 = arith.constant 0 : index
    %3 = vector.load %arg11[%c0, %c0_1] : memref<16x32xf32, #tpu.memory_space<vmem>>, vector<16x32xf32>
    %4 = arith.truncf %3 : vector<16x32xf32> to vector<16x32xbf16>
    %c0_2 = arith.constant 0 : index
    %c0_3 = arith.constant 0 : index
    %c0_4 = arith.constant 0 : index
    %5 = vector.load %arg3[%c0_2, %c0_3, %c0_4] : memref<1x32x16xbf16, #tpu.memory_space<vmem>>, vector<1x32x16xbf16>
    %6 = vector.shape_cast %5 : vector<1x32x16xbf16> to vector<32x16xbf16>
    %cst = arith.constant dense<0.000000e+00> : vector<16x16xf32>
    %7 = tpu.matmul %4, %6, %cst {dimension_numbers = #tpu.dot_dimension_numbers<[1], [0], [0], [1], [0, 0, 1, 1], [], []>} : vector<16x32xbf16>, vector<32x16xbf16>, vector<16x16xf32> -> vector<16x16xf32>
    %c0_5 = arith.constant 0 : index
    %c0_6 = arith.constant 0 : index
    %c0_7 = arith.constant 0 : index
    %8 = vector.load %arg4[%c0_5, %c0_6, %c0_7] : memref<1x32x16xbf16, #tpu.memory_space<vmem>>, vector<1x32x16xbf16>
    %9 = vector.shape_cast %8 : vector<1x32x16xbf16> to vector<32x16xbf16>
    %cst_8 = arith.constant dense<0.000000e+00> : vector<16x16xf32>
    %10 = tpu.matmul %4, %9, %cst_8 {dimension_numbers = #tpu.dot_dimension_numbers<[1], [0], [0], [1], [0, 0, 1, 1], [], []>} : vector<16x32xbf16>, vector<32x16xbf16>, vector<16x16xf32> -> vector<16x16xf32>
    %c0_9 = arith.constant 0 : index
    %c0_10 = arith.constant 0 : index
    %c0_11 = arith.constant 0 : index
    %11 = vector.load %arg5[%c0_9, %c0_10, %c0_11] : memref<1x32x32xbf16, #tpu.memory_space<vmem>>, vector<1x32x32xbf16>
    %12 = vector.shape_cast %11 : vector<1x32x32xbf16> to vector<32x32xbf16>
    %cst_12 = arith.constant dense<0.000000e+00> : vector<16x32xf32>
    %13 = tpu.matmul %4, %12, %cst_12 {dimension_numbers = #tpu.dot_dimension_numbers<[1], [0], [0], [1], [0, 0, 1, 1], [], []>} : vector<16x32xbf16>, vector<32x32xbf16>, vector<16x32xf32> -> vector<16x32xf32>
    %14 = vector.shape_cast %7 : vector<16x16xf32> to vector<2x8x16xf32>
    %15 = arith.truncf %14 : vector<2x8x16xf32> to vector<2x8x16xbf16>
    %16 = vector.shape_cast %10 : vector<16x16xf32> to vector<2x8x16xf32>
    %17 = arith.truncf %16 : vector<2x8x16xf32> to vector<2x8x16xbf16>
    %18 = vector.shape_cast %13 : vector<16x32xf32> to vector<2x8x32xf32>
    %19 = arith.truncf %18 : vector<2x8x32xf32> to vector<2x8x32xbf16>
    %cst_13 = arith.constant dense<0.000000e+00> : vector<2x8x8xf32>
    %20 = tpu.matmul %15, %17, %cst_13 {dimension_numbers = #tpu.dot_dimension_numbers<[2], [2], [1], [1], [0, 0, 0, 1, 1, 1], [0], [0]>} : vector<2x8x16xbf16>, vector<2x8x16xbf16>, vector<2x8x8xf32> -> vector<2x8x8xf32>
    %cst_14 = arith.constant dense<0xFF800000> : vector<2x8xf32>
    %21 = vector.multi_reduction <maximumf>, %20, %cst_14 [2] : vector<2x8x8xf32> to vector<2x8xf32>
    %22 = vector.shape_cast %21 : vector<2x8xf32> to vector<2x8x1xf32>
    %23 = vector.broadcast %22 : vector<2x8x1xf32> to vector<2x8x8xf32>
    %24 = arith.subf %20, %23 : vector<2x8x8xf32>
    %25 = math.exp %24 : vector<2x8x8xf32>
    %cst_15 = arith.constant dense<0.000000e+00> : vector<2x8xf32>
    %26 = vector.multi_reduction <add>, %25, %cst_15 [2] : vector<2x8x8xf32> to vector<2x8xf32>
    %27 = vector.shape_cast %26 : vector<2x8xf32> to vector<2x8x1xf32>
    %28 = vector.broadcast %27 : vector<2x8x1xf32> to vector<2x8x8xf32>
    %29 = arith.divf %25, %28 : vector<2x8x8xf32>
    %30 = arith.truncf %29 : vector<2x8x8xf32> to vector<2x8x8xbf16>
    %cst_16 = arith.constant dense<0.000000e+00> : vector<2x8x32xf32>
    %31 = tpu.matmul %30, %19, %cst_16 {dimension_numbers = #tpu.dot_dimension_numbers<[2], [1], [1], [2], [0, 0, 0, 1, 1, 2], [0], [0]>} : vector<2x8x8xbf16>, vector<2x8x32xbf16>, vector<2x8x32xf32> -> vector<2x8x32xf32>
    %32 = vector.shape_cast %31 : vector<2x8x32xf32> to vector<16x32xf32>
    %33 = arith.truncf %32 : vector<16x32xf32> to vector<16x32xbf16>
    %c0_17 = arith.constant 0 : index
    %c0_18 = arith.constant 0 : index
    %c0_19 = arith.constant 0 : index
    %34 = vector.load %arg6[%c0_17, %c0_18, %c0_19] : memref<1x32x32xbf16, #tpu.memory_space<vmem>>, vector<1x32x32xbf16>
    %35 = vector.shape_cast %34 : vector<1x32x32xbf16> to vector<32x32xbf16>
    %cst_20 = arith.constant dense<0.000000e+00> : vector<16x32xf32>
    %36 = tpu.matmul %33, %35, %cst_20 {dimension_numbers = #tpu.dot_dimension_numbers<[1], [0], [0], [1], [0, 0, 1, 1], [], []>} : vector<16x32xbf16>, vector<32x32xbf16>, vector<16x32xf32> -> vector<16x32xf32>
    %37 = arith.addf %3, %36 : vector<16x32xf32>
    %38 = arith.truncf %37 : vector<16x32xf32> to vector<16x32xbf16>
    %c0_21 = arith.constant 0 : index
    %c0_22 = arith.constant 0 : index
    %c0_23 = arith.constant 0 : index
    %39 = vector.load %arg7[%c0_21, %c0_22, %c0_23] : memref<1x32x32xbf16, #tpu.memory_space<vmem>>, vector<1x32x32xbf16>
    %40 = vector.shape_cast %39 : vector<1x32x32xbf16> to vector<32x32xbf16>
    %cst_24 = arith.constant dense<0.000000e+00> : vector<16x32xf32>
    %41 = tpu.matmul %38, %40, %cst_24 {dimension_numbers = #tpu.dot_dimension_numbers<[1], [0], [0], [1], [0, 0, 1, 1], [], []>} : vector<16x32xbf16>, vector<32x32xbf16>, vector<16x32xf32> -> vector<16x32xf32>
    %c0_25 = arith.constant 0 : index
    %c0_26 = arith.constant 0 : index
    %c0_27 = arith.constant 0 : index
    %42 = vector.load %arg8[%c0_25, %c0_26, %c0_27] : memref<1x1x32xf32, #tpu.memory_space<vmem>>, vector<1x1x32xf32>
    %43 = vector.shape_cast %42 : vector<1x1x32xf32> to vector<1x32xf32>
    %44 = vector.broadcast %43 : vector<1x32xf32> to vector<16x32xf32>
    %45 = arith.addf %41, %44 : vector<16x32xf32>
    %cst_28 = arith.constant 0.000000e+00 : f32
    %46 = vector.broadcast %cst_28 : f32 to vector<16x32xf32>
    %47 = arith.maximumf %45, %46 : vector<16x32xf32>
    %48 = arith.truncf %47 : vector<16x32xf32> to vector<16x32xbf16>
    %c0_29 = arith.constant 0 : index
    %c0_30 = arith.constant 0 : index
    %c0_31 = arith.constant 0 : index
    %49 = vector.load %arg9[%c0_29, %c0_30, %c0_31] : memref<1x32x32xbf16, #tpu.memory_space<vmem>>, vector<1x32x32xbf16>
    %50 = vector.shape_cast %49 : vector<1x32x32xbf16> to vector<32x32xbf16>
    %cst_32 = arith.constant dense<0.000000e+00> : vector<16x32xf32>
    %51 = tpu.matmul %48, %50, %cst_32 {dimension_numbers = #tpu.dot_dimension_numbers<[1], [0], [0], [1], [0, 0, 1, 1], [], []>} : vector<16x32xbf16>, vector<32x32xbf16>, vector<16x32xf32> -> vector<16x32xf32>
    %52 = arith.addf %37, %51 : vector<16x32xf32>
    %c0_33 = arith.constant 0 : index
    %c0_34 = arith.constant 0 : index
    %c0_35 = arith.constant 0 : index
    %53 = vector.load %arg10[%c0_33, %c0_34, %c0_35] : memref<1x1x32xf32, #tpu.memory_space<vmem>>, vector<1x1x32xf32>
    %54 = vector.shape_cast %53 : vector<1x1x32xf32> to vector<1x32xf32>
    %55 = vector.broadcast %54 : vector<1x32xf32> to vector<16x32xf32>
    %56 = arith.addf %52, %55 : vector<16x32xf32>
    %c0_36 = arith.constant 0 : index
    %c0_37 = arith.constant 0 : index
    %57 = vector.load %arg11[%c0_36, %c0_37] : memref<16x32xf32, #tpu.memory_space<vmem>>, vector<16x32xf32>
    tpu.vector_store %arg11[%c0_36, %c0_37], %56 {strides = array<i32>} : memref<16x32xf32, #tpu.memory_space<vmem>>, vector<16x32xf32>,
    return
  }
  func.func @transform_0(%arg0: i32, %arg1: i32) -> (i32, i32) {
    %c0_i32 = arith.constant 0 : i32
    %c0_i32_0 = arith.constant 0 : i32
    return %arg0, %c0_i32 : i32, i32
  }
  func.func @transform_1(%arg0: i32, %arg1: i32) -> (i32, i32, i32) {
    %c0_i32 = arith.constant 0 : i32
    %c0_i32_0 = arith.constant 0 : i32
    %c0_i32_1 = arith.constant 0 : i32
    return %arg1, %c0_i32, %c0_i32_0 : i32, i32, i32
  }
  func.func @transform_2(%arg0: i32, %arg1: i32) -> (i32, i32, i32) {
    %c0_i32 = arith.constant 0 : i32
    %c0_i32_0 = arith.constant 0 : i32
    %c0_i32_1 = arith.constant 0 : i32
    return %arg1, %c0_i32, %c0_i32_0 : i32, i32, i32
  }
  func.func @transform_3(%arg0: i32, %arg1: i32) -> (i32, i32, i32) {
    %c0_i32 = arith.constant 0 : i32
    %c0_i32_0 = arith.constant 0 : i32
    %c0_i32_1 = arith.constant 0 : i32
    return %arg1, %c0_i32, %c0_i32_0 : i32, i32, i32
  }
  func.func @transform_4(%arg0: i32, %arg1: i32) -> (i32, i32, i32) {
    %c0_i32 = arith.constant 0 : i32
    %c0_i32_0 = arith.constant 0 : i32
    %c0_i32_1 = arith.constant 0 : i32
    return %arg1, %c0_i32, %c0_i32_0 : i32, i32, i32
  }
  func.func @transform_5(%arg0: i32, %arg1: i32) -> (i32, i32, i32) {
    %c0_i32 = arith.constant 0 : i32
    %c0_i32_0 = arith.constant 0 : i32
    %c0_i32_1 = arith.constant 0 : i32
    return %arg1, %c0_i32, %c0_i32_0 : i32, i32, i32
  }
  func.func @transform_6(%arg0: i32, %arg1: i32) -> (i32, i32, i32) {
    %c0_i32 = arith.constant 0 : i32
    %c0_i32_0 = arith.constant 0 : i32
    %c0_i32_1 = arith.constant 0 : i32
    return %arg1, %c0_i32, %c0_i32_0 : i32, i32, i32
  }
  func.func @transform_7(%arg0: i32, %arg1: i32) -> (i32, i32, i32) {
    %c0_i32 = arith.constant 0 : i32
    %c0_i32_0 = arith.constant 0 : i32
    %c0_i32_1 = arith.constant 0 : i32
    return %arg1, %c0_i32, %c0_i32_0 : i32, i32, i32
  }
  func.func @transform_8(%arg0: i32, %arg1: i32) -> (i32, i32, i32) {
    %c0_i32 = arith.constant 0 : i32
    %c0_i32_0 = arith.constant 0 : i32
    %c0_i32_1 = arith.constant 0 : i32
    return %arg1, %c0_i32, %c0_i32_0 : i32, i32, i32
  }
  func.func @transform_9(%arg0: i32, %arg1: i32) -> (i32, i32) {
    %c0_i32 = arith.constant 0 : i32
    %c0_i32_0 = arith.constant 0 : i32
    return %arg0, %c0_i32 : i32, i32
  }
}

</mosaic_0001>

<llo_original>
// kernel: tpu_custom_call.1
$region0: #{tpu_custom_call.1}
  #allocation0 [shape = 'u32[]', space=smem, size = 0x4, offset = 0x4, fixed_abs, tag = 'smem constant byte address 0x4 - core index']
  #allocation1 [shape = 'u32[144,128]{1,0:T(1,128)}', space=vmem, size = 0x12000, scoped, tag = 'internal scratch']
  %s0 = inlined_call_operand.hbm [shape: f32[16,32], index: 0, kind: input, shape index: {}]
  %s1 = inlined_call_operand.vmem [shape: bf16[2,32,16], index: 1, kind: input, shape index: {}]
  %s2 = inlined_call_operand.vmem [shape: bf16[2,32,16], index: 2, kind: input, shape index: {}]
  %s3 = inlined_call_operand.vmem [shape: bf16[2,32,32], index: 3, kind: input, shape index: {}]
  %s4 = inlined_call_operand.vmem [shape: bf16[2,32,32], index: 4, kind: input, shape index: {}]
  %s5 = inlined_call_operand.vmem [shape: bf16[2,32,32], index: 5, kind: input, shape index: {}]
  %s6 = inlined_call_operand.vmem [shape: f32[2,1,32], index: 6, kind: input, shape index: {}]
  %s7 = inlined_call_operand.hbm [shape: bf16[2,32,32], index: 7, kind: input, shape index: {}]
  %s8 = inlined_call_operand.vmem [shape: f32[2,1,32], index: 8, kind: input, shape index: {}]
  %s9 = inlined_call_operand.hbm [shape: f32[16,32], index: 9, kind: output, shape index: {}]
  %s10 = sld [smem:[#allocation0]]
  $region81: #{tpu_custom_call.1} parent=0
    _
  %s12 = ssub.s32 1, %s10
  %s13 = scalar_select 0, %s12, %s10
  $region1: #{tpu_custom_call.1} parent=0
    #allocation2 [shape = 'u8[8192]{0}', space=vmem, size = 0x2000, scoped, tag = 'input window, operand 0, single buffered']
    #allocation3 [shape = 's32[2]{0}', space=sflag, size = 0x8, scoped, tag = 'scoped memory for tpu_custom_call.1']
    #allocation4 [shape = 's32[2]{0}', space=sflag, size = 0x8, scoped, tag = 'scoped memory for tpu_custom_call.1']
    #allocation5 [shape = 'u8[16384]{0}', space=vmem, size = 0x4000, scoped, tag = 'input window, operand 7']
    #allocation6 [shape = 's32[2]{0}', space=sflag, size = 0x8, scoped, tag = 'scoped memory for tpu_custom_call.1']
    #allocation7 [shape = 'u8[8192]{0}', space=vmem, size = 0x2000, scoped, tag = 'output window, operand 0, single buffered']
    %14 = vsyncpa [#allocation3], 0
    %15 = vsyncpa [#allocation6], 0
    %s16 = scalar_lea.sflag [#allocation6], 1
    %17 = vsyncpa %s16, 0
    %18 = vsyncpa [#allocation4], 0
    loop: start=0, step=1, limit=4
    $region2: #{tpu_custom_call.1} parent=1 // loop_pre_header
      _
    $region3: #{tpu_custom_call.1} parent=1 // loop_header
      %s20 = sphi 0, %s24
      %p21 = scmp.ge.s32.totalorder %s20, 4
      %s27 = sphi 0, %s39
      %s28 = sphi 0, %s35
      %s29 = sphi 0, %s27
      %s30 = sphi 0, %s28
      %s31 = sphi 0, %s29
      %s32 = sphi 0, %s30
      %s42 = sphi 0, %s44
      %s45 = sphi 0, %s42
      %s46 = sphi 0, %s45
      %s62 = sphi 0, %s46
      %s68 = sphi 0, %s70
      %s71 = sphi 0, %s68
      %s72 = sphi 0, %s71
      %s88 = sphi 0, %s72
      %s94 = sphi 0, %s96
      %s97 = sphi 0, %s94
      %s98 = sphi 0, %s97
      %s114 = sphi 0, %s98
      %s120 = sphi 0, %s122
      %s123 = sphi 0, %s120
      %s124 = sphi 0, %s123
      %s140 = sphi 0, %s124
      %s146 = sphi 0, %s148
      %s149 = sphi 0, %s146
      %s150 = sphi 0, %s149
      %s166 = sphi 0, %s150
      %s172 = sphi 0, %s174
      %s175 = sphi 0, %s172
      %s176 = sphi 0, %s175
      %s192 = sphi 0, %s176
      %s198 = sphi 0, %s200
      %s201 = sphi 0, %s198
      %s202 = sphi 0, %s201
      %s218 = sphi 0, %s202
      %s224 = sphi 0, %s226
      %s227 = sphi 0, %s224
      %s228 = sphi 0, %s227
      %s244 = sphi 0, %s228
      %s250 = sphi 0, %s252
      %s253 = sphi 0, %s250
      %s254 = sphi 0, %s253
      %s270 = sphi 0, %s254
      %s276 = sphi 0, %s278
      %s279 = sphi 0, %s276
      %s280 = sphi 0, %s279
      %s296 = sphi 0, %s280
    $region4: #{tpu_custom_call.1} parent=1 // loop_header_branch
      %23 = sbr.rel (%p21) target = $region8
    $region5: #{tpu_custom_call.1} parent=1 // loop_body
      %s25 = ssub.s32 %s20, 1
      %s26 = ssub.s32 %s20, 2
      %s33 = sadd.s32 1, %s28
      %p34 = scmp.ge.s32.totalorder %s33, 2
      %s35 = scalar_select %p34, 0, %s33
      %s36 = sadd.s32 1, %s27
      %s37 = scalar_select %p34, %s36, %s27
      %p38 = scmp.ge.s32.totalorder %s37, 1
      %s39 = scalar_select %p38, 0, %s37
      %s40 = ssub.s32 %s27, %s39
      %p41 = scmp.eq.s32.totalorder %s40, 0
      %s43 = sadd.s32 %s42, 1
      %s44 = scalar_select %p41, %s42, %s43
      %p47 = pneg %p41
      %p48 = scmp.eq.s32.totalorder %s20, 1
      %p49 = por %p47, %p48
      %p50 = scmp.ne.s32.totalorder %s42, %s45
      %p51 = scmp.eq.s32.totalorder %s20, 0
      %p52 = por %p50, %p51
      %p53 = scmp.ne.s32.totalorder %s42, %s45
      %p54 = scmp.eq.s32.totalorder %s25, 1
      %p55 = por %p53, %p54
      %p56 = scmp.ne.s32.totalorder %s45, %s46
      %p57 = scmp.eq.s32.totalorder %s25, 0
      %p58 = por %p56, %p57
      %p59 = scmp.ne.s32.totalorder %s45, %s46
      %p60 = scmp.eq.s32.totalorder %s26, 1
      %p61 = por %p59, %p60
      %p63 = scmp.ne.s32.totalorder %s46, %s62
      %p64 = scmp.eq.s32.totalorder %s26, 0
      %p65 = por %p63, %p64
      %s66 = ssub.s32 %s28, %s35
      %p67 = scmp.eq.s32.totalorder %s66, 0
      %s69 = sadd.s32 %s68, 1
      %s70 = scalar_select %p67, %s68, %s69
      %p73 = pneg %p67
      %p74 = scmp.eq.s32.totalorder %s20, 1
      %p75 = por %p73, %p74
      %p76 = scmp.ne.s32.totalorder %s68, %s71
      %p77 = scmp.eq.s32.totalorder %s20, 0
      %p78 = por %p76, %p77
      %p79 = scmp.ne.s32.totalorder %s68, %s71
      %p80 = scmp.eq.s32.totalorder %s25, 1
      %p81 = por %p79, %p80
      %p82 = scmp.ne.s32.totalorder %s71, %s72
      %p83 = scmp.eq.s32.totalorder %s25, 0
      %p84 = por %p82, %p83
      %p85 = scmp.ne.s32.totalorder %s71, %s72
      %p86 = scmp.eq.s32.totalorder %s26, 1
      %p87 = por %p85, %p86
      %p89 = scmp.ne.s32.totalorder %s72, %s88
      %p90 = scmp.eq.s32.totalorder %s26, 0
      %p91 = por %p89, %p90
      %s92 = ssub.s32 %s28, %s35
      %p93 = scmp.eq.s32.totalorder %s92, 0
      %s95 = sadd.s32 %s94, 1
      %s96 = scalar_select %p93, %s94, %s95
      %p99 = pneg %p93
      %p100 = scmp.eq.s32.totalorder %s20, 1
      %p101 = por %p99, %p100
      %p102 = scmp.ne.s32.totalorder %s94, %s97
      %p103 = scmp.eq.s32.totalorder %s20, 0
      %p104 = por %p102, %p103
      %p105 = scmp.ne.s32.totalorder %s94, %s97
      %p106 = scmp.eq.s32.totalorder %s25, 1
      %p107 = por %p105, %p106
      %p108 = scmp.ne.s32.totalorder %s97, %s98
      %p109 = scmp.eq.s32.totalorder %s25, 0
      %p110 = por %p108, %p109
      %p111 = scmp.ne.s32.totalorder %s97, %s98
      %p112 = scmp.eq.s32.totalorder %s26, 1
      %p113 = por %p111, %p112
      %p115 = scmp.ne.s32.totalorder %s98, %s114
      %p116 = scmp.eq.s32.totalorder %s26, 0
      %p117 = por %p115, %p116
      %s118 = ssub.s32 %s28, %s35
      %p119 = scmp.eq.s32.totalorder %s118, 0
      %s121 = sadd.s32 %s120, 1
      %s122 = scalar_select %p119, %s120, %s121
      %p125 = pneg %p119
      %p126 = scmp.eq.s32.totalorder %s20, 1
      %p127 = por %p125, %p126
      %p128 = scmp.ne.s32.totalorder %s120, %s123
      %p129 = scmp.eq.s32.totalorder %s20, 0
      %p130 = por %p128, %p129
      %p131 = scmp.ne.s32.totalorder %s120, %s123
      %p132 = scmp.eq.s32.totalorder %s25, 1
      %p133 = por %p131, %p132
      %p134 = scmp.ne.s32.totalorder %s123, %s124
      %p135 = scmp.eq.s32.totalorder %s25, 0
      %p136 = por %p134, %p135
      %p137 = scmp.ne.s32.totalorder %s123, %s124
      %p138 = scmp.eq.s32.totalorder %s26, 1
      %p139 = por %p137, %p138
      %p141 = scmp.ne.s32.totalorder %s124, %s140
      %p142 = scmp.eq.s32.totalorder %s26, 0
      %p143 = por %p141, %p142
      %s144 = ssub.s32 %s28, %s35
      %p145 = scmp.eq.s32.totalorder %s144, 0
      %s147 = sadd.s32 %s146, 1
      %s148 = scalar_select %p145, %s146, %s147
      %p151 = pneg %p145
      %p152 = scmp.eq.s32.totalorder %s20, 1
      %p153 = por %p151, %p152
      %p154 = scmp.ne.s32.totalorder %s146, %s149
      %p155 = scmp.eq.s32.totalorder %s20, 0
      %p156 = por %p154, %p155
      %p157 = scmp.ne.s32.totalorder %s146, %s149
      %p158 = scmp.eq.s32.totalorder %s25, 1
      %p159 = por %p157, %p158
      %p160 = scmp.ne.s32.totalorder %s149, %s150
      %p161 = scmp.eq.s32.totalorder %s25, 0
      %p162 = por %p160, %p161
      %p163 = scmp.ne.s32.totalorder %s149, %s150
      %p164 = scmp.eq.s32.totalorder %s26, 1
      %p165 = por %p163, %p164
      %p167 = scmp.ne.s32.totalorder %s150, %s166
      %p168 = scmp.eq.s32.totalorder %s26, 0
      %p169 = por %p167, %p168
      %s170 = ssub.s32 %s28, %s35
      %p171 = scmp.eq.s32.totalorder %s170, 0
      %s173 = sadd.s32 %s172, 1
      %s174 = scalar_select %p171, %s172, %s173
      %p177 = pneg %p171
      %p178 = scmp.eq.s32.totalorder %s20, 1
      %p179 = por %p177, %p178
      %p180 = scmp.ne.s32.totalorder %s172, %s175
      %p181 = scmp.eq.s32.totalorder %s20, 0
      %p182 = por %p180, %p181
      %p183 = scmp.ne.s32.totalorder %s172, %s175
      %p184 = scmp.eq.s32.totalorder %s25, 1
      %p185 = por %p183, %p184
      %p186 = scmp.ne.s32.totalorder %s175, %s176
      %p187 = scmp.eq.s32.totalorder %s25, 0
      %p188 = por %p186, %p187
      %p189 = scmp.ne.s32.totalorder %s175, %s176
      %p190 = scmp.eq.s32.totalorder %s26, 1
      %p191 = por %p189, %p190
      %p193 = scmp.ne.s32.totalorder %s176, %s192
      %p194 = scmp.eq.s32.totalorder %s26, 0
      %p195 = por %p193, %p194
      %s196 = ssub.s32 %s28, %s35
      %p197 = scmp.eq.s32.totalorder %s196, 0
      %s199 = sadd.s32 %s198, 1
      %s200 = scalar_select %p197, %s198, %s199
      %p203 = pneg %p197
      %p204 = scmp.eq.s32.totalorder %s20, 1
      %p205 = por %p203, %p204
      %p206 = scmp.ne.s32.totalorder %s198, %s201
      %p207 = scmp.eq.s32.totalorder %s20, 0
      %p208 = por %p206, %p207
      %p209 = scmp.ne.s32.totalorder %s198, %s201
      %p210 = scmp.eq.s32.totalorder %s25, 1
      %p211 = por %p209, %p210
      %p212 = scmp.ne.s32.totalorder %s201, %s202
      %p213 = scmp.eq.s32.totalorder %s25, 0
      %p214 = por %p212, %p213
      %p215 = scmp.ne.s32.totalorder %s201, %s202
      %p216 = scmp.eq.s32.totalorder %s26, 1
      %p217 = por %p215, %p216
      %p219 = scmp.ne.s32.totalorder %s202, %s218
      %p220 = scmp.eq.s32.totalorder %s26, 0
      %p221 = por %p219, %p220
      %s222 = ssub.s32 %s28, %s35
      %p223 = scmp.eq.s32.totalorder %s222, 0
      %s225 = sadd.s32 %s224, 1
      %s226 = scalar_select %p223, %s224, %s225
      %p229 = pneg %p223
      %p230 = scmp.eq.s32.totalorder %s20, 1
      %p231 = por %p229, %p230
      %p232 = scmp.ne.s32.totalorder %s224, %s227
      %p233 = scmp.eq.s32.totalorder %s20, 0
      %p234 = por %p232, %p233
      %p235 = scmp.ne.s32.totalorder %s224, %s227
      %p236 = scmp.eq.s32.totalorder %s25, 1
      %p237 = por %p235, %p236
      %p238 = scmp.ne.s32.totalorder %s227, %s228
      %p239 = scmp.eq.s32.totalorder %s25, 0
      %p240 = por %p238, %p239
      %p241 = scmp.ne.s32.totalorder %s227, %s228
      %p242 = scmp.eq.s32.totalorder %s26, 1
      %p243 = por %p241, %p242
      %p245 = scmp.ne.s32.totalorder %s228, %s244
      %p246 = scmp.eq.s32.totalorder %s26, 0
      %p247 = por %p245, %p246
      %s248 = ssub.s32 %s28, %s35
      %p249 = scmp.eq.s32.totalorder %s248, 0
      %s251 = sadd.s32 %s250, 1
      %s252 = scalar_select %p249, %s250, %s251
      %p255 = pneg %p249
      %p256 = scmp.eq.s32.totalorder %s20, 1
      %p257 = por %p255, %p256
      %p258 = scmp.ne.s32.totalorder %s250, %s253
      %p259 = scmp.eq.s32.totalorder %s20, 0
      %p260 = por %p258, %p259
      %p261 = scmp.ne.s32.totalorder %s250, %s253
      %p262 = scmp.eq.s32.totalorder %s25, 1
      %p263 = por %p261, %p262
      %p264 = scmp.ne.s32.totalorder %s253, %s254
      %p265 = scmp.eq.s32.totalorder %s25, 0
      %p266 = por %p264, %p265
      %p267 = scmp.ne.s32.totalorder %s253, %s254
      %p268 = scmp.eq.s32.totalorder %s26, 1
      %p269 = por %p267, %p268
      %p271 = scmp.ne.s32.totalorder %s254, %s270
      %p272 = scmp.eq.s32.totalorder %s26, 0
      %p273 = por %p271, %p272
      %s274 = ssub.s32 %s27, %s39
      %p275 = scmp.eq.s32.totalorder %s274, 0
      %s277 = sadd.s32 %s276, 1
      %s278 = scalar_select %p275, %s276, %s277
      %p281 = pneg %p275
      %p282 = scmp.eq.s32.totalorder %s20, 1
      %p283 = por %p281, %p282
      %p284 = scmp.ne.s32.totalorder %s276, %s279
      %p285 = scmp.eq.s32.totalorder %s20, 0
      %p286 = por %p284, %p285
      %p287 = scmp.ne.s32.totalorder %s276, %s279
      %p288 = scmp.eq.s32.totalorder %s25, 1
      %p289 = por %p287, %p288
      %p290 = scmp.ne.s32.totalorder %s279, %s280
      %p291 = scmp.eq.s32.totalorder %s25, 0
      %p292 = por %p290, %p291
      %p293 = scmp.ne.s32.totalorder %s279, %s280
      %p294 = scmp.eq.s32.totalorder %s26, 1
      %p295 = por %p293, %p294
      %p297 = scmp.ne.s32.totalorder %s280, %s296
      %p298 = scmp.eq.s32.totalorder %s26, 0
      %p299 = por %p297, %p298
      %p300 = scmp.le.s32.totalorder 1, %s20
      %p301 = scmp.lt.s32.totalorder %s20, 3
      %p302 = pnand %p300, %p301
      %p303 = pneg %p302
      // Predicated region
      $region9: #{tpu_custom_call.1} parent=5 // pred_check
        _
      $region10: #{tpu_custom_call.1} parent=5 // pred_check_branch
        %305 = sbr.rel (%p302) target = $region12
      $region11: #{tpu_custom_call.1} parent=5 // pred_region
        %s306 = ssub.s32 %s20, 1
        // Predicated region
        $region13: #{tpu_custom_call.1} parent=11 // pred_check
          %p307 = pneg %p58
        $region14: #{tpu_custom_call.1} parent=11 // pred_check_branch
          %309 = sbr.rel (%p307) target = $region16
        $region15: #{tpu_custom_call.1} parent=11 // pred_region
          %s310 = smul.u32 2, %s29
          %s312 = ssub.s32 256, 256
          %313 = vsyncadd [#allocation3], %s312
          %s314 = smul.addr %s310, 128
          %s315 = scalar_lea.hbm %s0, %s314
          %s316 = sshll.u32 [#allocation2], 4
          %s317 = int_to_ptr.vmem [resolvable:$true] %s316
          %322 = dma.hbm_to_vmem [thread:$0]  %s315, 256, %s317, [#allocation3], 128, 128, 8
        $region16: #{tpu_custom_call.1} parent=11 // pred_fallthru
          _
      $region12: #{tpu_custom_call.1} parent=5 // pred_fallthru
        _
      %p323 = scmp.lt.s32.totalorder %s20, 2
      // Predicated region
      $region17: #{tpu_custom_call.1} parent=5 // pred_check
        %p324 = pneg %p323
      $region18: #{tpu_custom_call.1} parent=5 // pred_check_branch
        %326 = sbr.rel (%p324) target = $region20
      $region19: #{tpu_custom_call.1} parent=5 // pred_region
        // Predicated region
        $region21: #{tpu_custom_call.1} parent=19 // pred_check
          %p327 = pneg %p78
        $region22: #{tpu_custom_call.1} parent=19 // pred_check_branch
          %329 = sbr.rel (%p327) target = $region24
        $region23: #{tpu_custom_call.1} parent=19 // pred_region
          %p330 = scmp.lt.s32.totalorder %s28, 1
          %s331 = scalar_select %p330, %s28, 1
          %s332 = smul.addr %s331, 4
          %s333 = smul.addr %s332, 4
          %s334 = scalar_lea.vmem %s1, %s333
        $region24: #{tpu_custom_call.1} parent=19 // pred_fallthru
          _
        // Predicated region
        $region25: #{tpu_custom_call.1} parent=19 // pred_check
          %p335 = pneg %p104
        $region26: #{tpu_custom_call.1} parent=19 // pred_check_branch
          %337 = sbr.rel (%p335) target = $region28
        $region27: #{tpu_custom_call.1} parent=19 // pred_region
          %p338 = scmp.lt.s32.totalorder %s28, 1
          %s339 = scalar_select %p338, %s28, 1
          %s340 = smul.addr %s339, 4
          %s341 = smul.addr %s340, 4
          %s342 = scalar_lea.vmem %s2, %s341
        $region28: #{tpu_custom_call.1} parent=19 // pred_fallthru
          _
        // Predicated region
        $region29: #{tpu_custom_call.1} parent=19 // pred_check
          %p343 = pneg %p130
        $region30: #{tpu_custom_call.1} parent=19 // pred_check_branch
          %345 = sbr.rel (%p343) target = $region32
        $region31: #{tpu_custom_call.1} parent=19 // pred_region
          %p346 = scmp.lt.s32.totalorder %s28, 1
          %s347 = scalar_select %p346, %s28, 1
          %s348 = smul.addr %s347, 4
          %s349 = smul.addr %s348, 4
          %s350 = scalar_lea.vmem %s3, %s349
        $region32: #{tpu_custom_call.1} parent=19 // pred_fallthru
          _
        // Predicated region
        $region33: #{tpu_custom_call.1} parent=19 // pred_check
          %p351 = pneg %p156
        $region34: #{tpu_custom_call.1} parent=19 // pred_check_branch
          %353 = sbr.rel (%p351) target = $region36
        $region35: #{tpu_custom_call.1} parent=19 // pred_region
          %p354 = scmp.lt.s32.totalorder %s28, 1
          %s355 = scalar_select %p354, %s28, 1
          %s356 = smul.addr %s355, 4
          %s357 = smul.addr %s356, 4
          %s358 = scalar_lea.vmem %s4, %s357
        $region36: #{tpu_custom_call.1} parent=19 // pred_fallthru
          _
        // Predicated region
        $region37: #{tpu_custom_call.1} parent=19 // pred_check
          %p359 = pneg %p182
        $region38: #{tpu_custom_call.1} parent=19 // pred_check_branch
          %361 = sbr.rel (%p359) target = $region40
        $region39: #{tpu_custom_call.1} parent=19 // pred_region
          %p362 = scmp.lt.s32.totalorder %s28, 1
          %s363 = scalar_select %p362, %s28, 1
          %s364 = smul.addr %s363, 4
          %s365 = smul.addr %s364, 4
          %s366 = scalar_lea.vmem %s5, %s365
        $region40: #{tpu_custom_call.1} parent=19 // pred_fallthru
          _
        // Predicated region
        $region41: #{tpu_custom_call.1} parent=19 // pred_check
          %p367 = pneg %p208
        $region42: #{tpu_custom_call.1} parent=19 // pred_check_branch
          %369 = sbr.rel (%p367) target = $region44
        $region43: #{tpu_custom_call.1} parent=19 // pred_region
          %p370 = scmp.lt.s32.totalorder %s28, 1
          %s371 = scalar_select %p370, %s28, 1
          %s372 = scalar_lea.vmem %s6, %s371
        $region44: #{tpu_custom_call.1} parent=19 // pred_fallthru
          _
        // Predicated region
        $region45: #{tpu_custom_call.1} parent=19 // pred_check
          %p373 = pneg %p234
        $region46: #{tpu_custom_call.1} parent=19 // pred_check_branch
          %375 = sbr.rel (%p373) target = $region48
        $region47: #{tpu_custom_call.1} parent=19 // pred_region
          %s376 = sand.u32 %s224, 1
          %s377 = scalar_lea.sflag [#allocation6], %s376
          %s378 = sand.u32 %s224, 1
          %s379 = smul.addr %s378, 16
          %s380 = scalar_lea.vmem [#allocation5], %s379
          %s382 = ssub.s32 256, 256
          %383 = vsyncadd %s377, %s382
          %s384 = smul.addr %s28, 4
          %s385 = smul.addr %s384, 64
          %s386 = scalar_lea.hbm %s7, %s385
          %s387 = sshll.u32 %s380, 4
          %s388 = int_to_ptr.vmem [resolvable:$true] %s387
          %393 = dma.hbm_to_vmem [thread:$0]  %s386, 256, %s388, %s377, 64, 64, 4
        $region48: #{tpu_custom_call.1} parent=19 // pred_fallthru
          _
        // Predicated region
        $region49: #{tpu_custom_call.1} parent=19 // pred_check
          %p394 = pneg %p260
        $region50: #{tpu_custom_call.1} parent=19 // pred_check_branch
          %396 = sbr.rel (%p394) target = $region52
        $region51: #{tpu_custom_call.1} parent=19 // pred_region
          %p397 = scmp.lt.s32.totalorder %s28, 1
          %s398 = scalar_select %p397, %s28, 1
          %s399 = scalar_lea.vmem %s8, %s398
        $region52: #{tpu_custom_call.1} parent=19 // pred_fallthru
          _
      $region20: #{tpu_custom_call.1} parent=5 // pred_fallthru
        _
      %p400 = scmp.le.s32.totalorder 1, %s20
      %p401 = scmp.lt.s32.totalorder %s20, 3
      %p402 = pnand %p400, %p401
      %p403 = pneg %p402
      // Predicated region
      $region53: #{tpu_custom_call.1} parent=5 // pred_check
        _
      $region54: #{tpu_custom_call.1} parent=5 // pred_check_branch
        %405 = sbr.rel (%p402) target = $region56
      $region55: #{tpu_custom_call.1} parent=5 // pred_region
        %s406 = ssub.s32 %s20, 1
        // Predicated region
        $region57: #{tpu_custom_call.1} parent=55 // pred_check
          %p407 = pneg %p58
        $region58: #{tpu_custom_call.1} parent=55 // pred_check_branch
          %409 = sbr.rel (%p407) target = $region60
        $region59: #{tpu_custom_call.1} parent=55 // pred_region
          %410 = dma.done [#allocation3], 256
        $region60: #{tpu_custom_call.1} parent=55 // pred_fallthru
          _
        %s411 = sand.u32 %s227, 1
        %s412 = scalar_lea.sflag [#allocation6], %s411
        %s413 = sand.u32 %s227, 1
        %s414 = smul.addr %s413, 16
        %s415 = scalar_lea.vmem [#allocation5], %s414
        // Predicated region
        $region61: #{tpu_custom_call.1} parent=55 // pred_check
          %p416 = pneg %p240
        $region62: #{tpu_custom_call.1} parent=55 // pred_check_branch
          %418 = sbr.rel (%p416) target = $region64
        $region63: #{tpu_custom_call.1} parent=55 // pred_region
          %419 = dma.done %s412, 256
        $region64: #{tpu_custom_call.1} parent=55 // pred_fallthru
          _
        %p420 = pneg %p58
        %p421 = pneg %p55
        %p422 = scmp.lt.s32.totalorder %s30, 1
        %s423 = scalar_select %p422, %s30, 1
        %s424 = smul.addr %s423, 4
        %s425 = smul.addr %s424, 4
        %s426 = scalar_lea.vmem %s1, %s425
        %p427 = pneg %p84
        %p428 = pneg %p81
        %p429 = scmp.lt.s32.totalorder %s30, 1
        %s430 = scalar_select %p429, %s30, 1
        %s431 = smul.addr %s430, 4
        %s432 = smul.addr %s431, 4
        %s433 = scalar_lea.vmem %s2, %s432
        %p434 = pneg %p110
        %p435 = pneg %p107
        %p436 = scmp.lt.s32.totalorder %s30, 1
        %s437 = scalar_select %p436, %s30, 1
        %s438 = smul.addr %s437, 4
        %s439 = smul.addr %s438, 4
        %s440 = scalar_lea.vmem %s3, %s439
        %p441 = pneg %p136
        %p442 = pneg %p133
        %p443 = scmp.lt.s32.totalorder %s30, 1
        %s444 = scalar_select %p443, %s30, 1
        %s445 = smul.addr %s444, 4
        %s446 = smul.addr %s445, 4
        %s447 = scalar_lea.vmem %s4, %s446
        %p448 = pneg %p162
        %p449 = pneg %p159
        %p450 = scmp.lt.s32.totalorder %s30, 1
        %s451 = scalar_select %p450, %s30, 1
        %s452 = smul.addr %s451, 4
        %s453 = smul.addr %s452, 4
        %s454 = scalar_lea.vmem %s5, %s453
        %p455 = pneg %p188
        %p456 = pneg %p185
        %p457 = scmp.lt.s32.totalorder %s30, 1
        %s458 = scalar_select %p457, %s30, 1
        %s459 = scalar_lea.vmem %s6, %s458
        %p460 = pneg %p214
        %p461 = pneg %p211
        %s462 = sand.u32 %s227, 1
        %s463 = scalar_lea.sflag [#allocation6], %s462
        %s464 = sand.u32 %s227, 1
        %s465 = smul.addr %s464, 16
        %s466 = scalar_lea.vmem [#allocation5], %s465
        %p467 = pneg %p240
        %p468 = pneg %p237
        %p469 = scmp.lt.s32.totalorder %s30, 1
        %s470 = scalar_select %p469, %s30, 1
        %s471 = scalar_lea.vmem %s8, %s470
        %p472 = pneg %p266
        %p473 = pneg %p263
        %p474 = pneg %p292
        %p475 = pneg %p289
        %s476 = smul.u32 2, %s29
        %p477 = scmp.lt.s32.totalorder %s30, 1
        %s478 = scalar_select %p477, %s30, 1
        %s479 = smul.addr %s478, 4
        %s480 = smul.addr %s479, 4
        %s481 = scalar_lea.vmem %s1, %s480
        %p482 = scmp.lt.s32.totalorder %s30, 1
        %s483 = scalar_select %p482, %s30, 1
        %s484 = smul.addr %s483, 4
        %s485 = smul.addr %s484, 4
        %s486 = scalar_lea.vmem %s2, %s485
        %p487 = scmp.lt.s32.totalorder %s30, 1
        %s488 = scalar_select %p487, %s30, 1
        %s489 = smul.addr %s488, 4
        %s490 = smul.addr %s489, 4
        %s491 = scalar_lea.vmem %s3, %s490
        %p492 = scmp.lt.s32.totalorder %s30, 1
        %s493 = scalar_select %p492, %s30, 1
        %s494 = smul.addr %s493, 4
        %s495 = smul.addr %s494, 4
        %s496 = scalar_lea.vmem %s4, %s495
        %p497 = scmp.lt.s32.totalorder %s30, 1
        %s498 = scalar_select %p497, %s30, 1
        %s499 = smul.addr %s498, 4
        %s500 = smul.addr %s499, 4
        %s501 = scalar_lea.vmem %s5, %s500
        %p502 = scmp.lt.s32.totalorder %s30, 1
        %s503 = scalar_select %p502, %s30, 1
        %s504 = scalar_lea.vmem %s6, %s503
        %p505 = scmp.lt.s32.totalorder %s30, 1
        %s506 = scalar_select %p505, %s30, 1
        %s507 = scalar_lea.vmem %s8, %s506
        %s508 = smul.u32 2, %s29
        %p510 = scmp.eq.s32.totalorder %s30, 0
        // Predicated region
        $region65: #{tpu_custom_call.1} parent=55 // pred_check
          %p511 = pneg %p510
        $region66: #{tpu_custom_call.1} parent=55 // pred_check_branch
          %513 = sbr.rel (%p511) target = $region68
        $region67: #{tpu_custom_call.1} parent=55 // pred_region
          %v514 = vld [vmem:[#allocation2] sm:$0xff]
          %v515 = vld [vmem:[#allocation2 + $0x8] sm:$0xff]
          %vm516 = vcmask 261120
          %517 = vst.msk [vmem:[#allocation7] sm:$0xff] %vm516, %v514
          %518 = vst.msk [vmem:[#allocation7 + $0x8] sm:$0xff] %vm516, %v515
        $region68: #{tpu_custom_call.1} parent=55 // pred_fallthru
          _
        %v519 = vld [vmem:[#allocation7] sm:$0xff]
        %v520 = vld [vmem:[#allocation7 + $0x8] sm:$0xff]
        %v521 = vpack.c.bf16 %v520, %v519
        %v522 = vld [vmem:[%s481] sm:$0xf]
        %v523 = vld [vmem:[%s481 + $0x4] sm:$0xf]
        %v524 = vld [vmem:[%s481 + $0x8] sm:$0xf]
        %v525 = vld [vmem:[%s481 + $0xc] sm:$0xf]
        %v530 = vunpack.c.l.b16 %v522
        %v531 = vunpack.c.l.b16 %v523
        %v532 = vunpack.c.l.b16 %v524
        %v533 = vunpack.c.l.b16 %v525
        %v534 = vpack.c.b16 %v531, %v530
        %v535 = vpack.c.b16 %v533, %v532
        %vm538 = vcmask 261120
        %v540 = vsel %vm538, %v521, 0
        %542 = vmatprep.subr.bf16.mxu0 0
        %543 = vmatpush1.bf16.msra.mxu0 %v534
        %544 = vmatprep.subr.bf16.mxu0 0
        %545 = vmatpush1.bf16.msra.mxu0 %v535
        %546 = vmatprep.subr.bf16.mxu0 0
        %547 = vmatpush1.bf16.msra.mxu0 0
        %548 = vmatprep.subr.bf16.mxu0 0
        %549 = vmatpush1.bf16.msra.mxu0 0
        %550 = vmatprep.subr.bf16.mxu0 0
        %551 = vmatpush1.bf16.msra.mxu0 0
        %552 = vmatprep.subr.bf16.mxu0 0
        %553 = vmatpush1.bf16.msra.mxu0 0
        %554 = vmatprep.subr.bf16.mxu0 0
        %555 = vmatpush1.bf16.msra.mxu0 0
        %556 = vmatprep.subr.bf16.mxu0 0
        %557 = vmatpush1.bf16.msra.mxu0 0
        %558 = vmatprep.subr.bf16.mxu0 0
        %559 = vmatpush1.bf16.msra.mxu0 0
        %560 = vmatprep.subr.bf16.mxu0 0
        %561 = vmatpush1.bf16.msra.mxu0 0
        %562 = vmatprep.subr.bf16.mxu0 0
        %563 = vmatpush1.bf16.msra.mxu0 0
        %564 = vmatprep.subr.bf16.mxu0 0
        %565 = vmatpush1.bf16.msra.mxu0 0
        %566 = vmatprep.subr.bf16.mxu0 0
        %567 = vmatpush1.bf16.msra.mxu0 0
        %568 = vmatprep.subr.bf16.mxu0 0
        %569 = vmatpush1.bf16.msra.mxu0 0
        %570 = vmatprep.subr.bf16.mxu0 0
        %571 = vmatpush1.bf16.msra.mxu0 0
        %572 = vmatprep.subr.bf16.mxu0 0
        %573 = vmatpush1.bf16.msra.mxu0 0
        %574 = vmatprep.mubr.bf16.mxu0 0
        %575 = vmatmul.mubr.bf16.gmra.mrb[0].mxu0 %v540
        %v576 = vpop.f32.mrb[0].mxu0
        %v577 = vadd.f32 0.0, %v576
        %v578 = vpop.f32.mrb[0].mxu0
        %v579 = vpop.f32.mrb[0].mxu0
        %v580 = vadd.f32 0.0, %v579
        %v581 = vpop.f32.mrb[0].mxu0
        %582 = vdwg.mxu0
        %v583 = vld [vmem:[%s486] sm:$0xf]
        %v584 = vld [vmem:[%s486 + $0x4] sm:$0xf]
        %v585 = vld [vmem:[%s486 + $0x8] sm:$0xf]
        %v586 = vld [vmem:[%s486 + $0xc] sm:$0xf]
        %v591 = vunpack.c.l.b16 %v583
        %v592 = vunpack.c.l.b16 %v584
        %v593 = vunpack.c.l.b16 %v585
        %v594 = vunpack.c.l.b16 %v586
        %v595 = vpack.c.b16 %v592, %v591
        %v596 = vpack.c.b16 %v594, %v593
        %599 = vmatprep.subr.bf16.mxu0 0
        %600 = vmatpush1.bf16.msra.mxu0 %v595
        %601 = vmatprep.subr.bf16.mxu0 0
        %602 = vmatpush1.bf16.msra.mxu0 %v596
        %603 = vmatprep.subr.bf16.mxu0 0
        %604 = vmatpush1.bf16.msra.mxu0 0
        %605 = vmatprep.subr.bf16.mxu0 0
        %606 = vmatpush1.bf16.msra.mxu0 0
        %607 = vmatprep.subr.bf16.mxu0 0
        %608 = vmatpush1.bf16.msra.mxu0 0
        %609 = vmatprep.subr.bf16.mxu0 0
        %610 = vmatpush1.bf16.msra.mxu0 0
        %611 = vmatprep.subr.bf16.mxu0 0
        %612 = vmatpush1.bf16.msra.mxu0 0
        %613 = vmatprep.subr.bf16.mxu0 0
        %614 = vmatpush1.bf16.msra.mxu0 0
        %615 = vmatprep.subr.bf16.mxu0 0
        %616 = vmatpush1.bf16.msra.mxu0 0
        %617 = vmatprep.subr.bf16.mxu0 0
        %618 = vmatpush1.bf16.msra.mxu0 0
        %619 = vmatprep.subr.bf16.mxu0 0
        %620 = vmatpush1.bf16.msra.mxu0 0
        %621 = vmatprep.subr.bf16.mxu0 0
        %622 = vmatpush1.bf16.msra.mxu0 0
        %623 = vmatprep.subr.bf16.mxu0 0
        %624 = vmatpush1.bf16.msra.mxu0 0
        %625 = vmatprep.subr.bf16.mxu0 0
        %626 = vmatpush1.bf16.msra.mxu0 0
        %627 = vmatprep.subr.bf16.mxu0 0
        %628 = vmatpush1.bf16.msra.mxu0 0
        %629 = vmatprep.subr.bf16.mxu0 0
        %630 = vmatpush1.bf16.msra.mxu0 0
        %631 = vmatprep.mubr.bf16.mxu0 0
        %632 = vmatmul.mubr.bf16.gmra.mrb[0].mxu0 %v540
        %v633 = vpop.f32.mrb[0].mxu0
        %v634 = vadd.f32 0.0, %v633
        %v635 = vpop.f32.mrb[0].mxu0
        %v636 = vpop.f32.mrb[0].mxu0
        %v637 = vadd.f32 0.0, %v636
        %v638 = vpop.f32.mrb[0].mxu0
        %639 = vdwg.mxu0
        %v640 = vld [vmem:[%s491] sm:$0xf]
        %v641 = vld [vmem:[%s491 + $0x4] sm:$0xf]
        %v642 = vld [vmem:[%s491 + $0x8] sm:$0xf]
        %v643 = vld [vmem:[%s491 + $0xc] sm:$0xf]
        %v648 = vunpack.c.l.b16 %v640
        %v649 = vunpack.c.l.b16 %v641
        %v650 = vunpack.c.l.b16 %v642
        %v651 = vunpack.c.l.b16 %v643
        %v652 = vpack.c.b16 %v649, %v648
        %v653 = vpack.c.b16 %v651, %v650
        %656 = vmatprep.subr.bf16.mxu0 0
        %657 = vmatpush1.bf16.msra.mxu0 %v652
        %658 = vmatprep.subr.bf16.mxu0 0
        %659 = vmatpush1.bf16.msra.mxu0 %v653
        %660 = vmatprep.subr.bf16.mxu0 0
        %661 = vmatpush1.bf16.msra.mxu0 0
        %662 = vmatprep.subr.bf16.mxu0 0
        %663 = vmatpush1.bf16.msra.mxu0 0
        %664 = vmatprep.subr.bf16.mxu0 0
        %665 = vmatpush1.bf16.msra.mxu0 0
        %666 = vmatprep.subr.bf16.mxu0 0
        %667 = vmatpush1.bf16.msra.mxu0 0
        %668 = vmatprep.subr.bf16.mxu0 0
        %669 = vmatpush1.bf16.msra.mxu0 0
        %670 = vmatprep.subr.bf16.mxu0 0
        %671 = vmatpush1.bf16.msra.mxu0 0
        %672 = vmatprep.subr.bf16.mxu0 0
        %673 = vmatpush1.bf16.msra.mxu0 0
        %674 = vmatprep.subr.bf16.mxu0 0
        %675 = vmatpush1.bf16.msra.mxu0 0
        %676 = vmatprep.subr.bf16.mxu0 0
        %677 = vmatpush1.bf16.msra.mxu0 0
        %678 = vmatprep.subr.bf16.mxu0 0
        %679 = vmatpush1.bf16.msra.mxu0 0
        %680 = vmatprep.subr.bf16.mxu0 0
        %681 = vmatpush1.bf16.msra.mxu0 0
        %682 = vmatprep.subr.bf16.mxu0 0
        %683 = vmatpush1.bf16.msra.mxu0 0
        %684 = vmatprep.subr.bf16.mxu0 0
        %685 = vmatpush1.bf16.msra.mxu0 0
        %686 = vmatprep.subr.bf16.mxu0 0
        %687 = vmatpush1.bf16.msra.mxu0 0
        %688 = vmatprep.mubr.bf16.mxu0 0
        %689 = vmatmul.mubr.bf16.gmra.mrb[0].mxu0 %v540
        %v690 = vpop.f32.mrb[0].mxu0
        %v691 = vadd.f32 0.0, %v690
        %v692 = vpop.f32.mrb[0].mxu0
        %v693 = vpop.f32.mrb[0].mxu0
        %v694 = vadd.f32 0.0, %v693
        %v695 = vpop.f32.mrb[0].mxu0
        %696 = vdwg.mxu0
        %v697 = vpack.c.bf16 %v577, %v577
        %v698 = vpack.c.bf16 %v580, %v580
        %v699 = vpack.c.bf16 %v634, %v634
        %v700 = vpack.c.bf16 %v637, %v637
        %v701 = vpack.c.bf16 %v691, %v691
        %v702 = vpack.c.bf16 %v694, %v694
        %vm703 = vcmask 130048
        %v705 = vsel %vm703, %v697, 0
        %v708 = vsel %vm703, %v699, 0
        %710 = vmatprep.subr.bf16.mxu0 0
        %711 = vmatpush1.bf16.xpose.msra.mxu0 %v708
        %712 = vmatprep.subr.bf16.mxu0 0
        %713 = vmatpush1.bf16.xpose.msra.mxu0 0
        %714 = vmatprep.subr.bf16.mxu0 0
        %715 = vmatpush1.bf16.xpose.msra.mxu0 0
        %716 = vmatprep.subr.bf16.mxu0 0
        %717 = vmatpush1.bf16.xpose.msra.mxu0 0
        %718 = vmatprep.subr.bf16.mxu0 0
        %719 = vmatpush1.bf16.xpose.msra.mxu0 0
        %720 = vmatprep.subr.bf16.mxu0 0
        %721 = vmatpush1.bf16.xpose.msra.mxu0 0
        %722 = vmatprep.subr.bf16.mxu0 0
        %723 = vmatpush1.bf16.xpose.msra.mxu0 0
        %724 = vmatprep.subr.bf16.mxu0 0
        %725 = vmatpush1.bf16.xpose.msra.mxu0 0
        %726 = vmatprep.subr.bf16.mxu0 0
        %727 = vmatpush1.bf16.xpose.msra.mxu0 0
        %728 = vmatprep.subr.bf16.mxu0 0
        %729 = vmatpush1.bf16.xpose.msra.mxu0 0
        %730 = vmatprep.subr.bf16.mxu0 0
        %731 = vmatpush1.bf16.xpose.msra.mxu0 0
        %732 = vmatprep.subr.bf16.mxu0 0
        %733 = vmatpush1.bf16.xpose.msra.mxu0 0
        %734 = vmatprep.subr.bf16.mxu0 0
        %735 = vmatpush1.bf16.xpose.msra.mxu0 0
        %736 = vmatprep.subr.bf16.mxu0 0
        %737 = vmatpush1.bf16.xpose.msra.mxu0 0
        %738 = vmatprep.subr.bf16.mxu0 0
        %739 = vmatpush1.bf16.xpose.msra.mxu0 0
        %740 = vmatprep.subr.bf16.mxu0 0
        %741 = vmatpush1.bf16.xpose.msra.mxu0 0
        %742 = vmatprep.mubr.bf16.mxu0 0
        %743 = vmatmul.mubr.bf16.gmra.mrb[0].mxu0 %v705
        %v744 = vpop.f32.mrb[0].mxu0
        %v745 = vadd.f32 0.0, %v744
        %v746 = vpop.f32.mrb[0].mxu0
        %v747 = vpop.f32.mrb[0].mxu0
        %v748 = vpop.f32.mrb[0].mxu0
        %749 = vdwg.mxu0
        %v751 = vsel %vm703, %v698, 0
        %v754 = vsel %vm703, %v700, 0
        %756 = vmatprep.subr.bf16.mxu0 0
        %757 = vmatpush1.bf16.xpose.msra.mxu0 %v754
        %758 = vmatprep.subr.bf16.mxu0 0
        %759 = vmatpush1.bf16.xpose.msra.mxu0 0
        %760 = vmatprep.subr.bf16.mxu0 0
        %761 = vmatpush1.bf16.xpose.msra.mxu0 0
        %762 = vmatprep.subr.bf16.mxu0 0
        %763 = vmatpush1.bf16.xpose.msra.mxu0 0
        %764 = vmatprep.subr.bf16.mxu0 0
        %765 = vmatpush1.bf16.xpose.msra.mxu0 0
        %766 = vmatprep.subr.bf16.mxu0 0
        %767 = vmatpush1.bf16.xpose.msra.mxu0 0
        %768 = vmatprep.subr.bf16.mxu0 0
        %769 = vmatpush1.bf16.xpose.msra.mxu0 0
        %770 = vmatprep.subr.bf16.mxu0 0
        %771 = vmatpush1.bf16.xpose.msra.mxu0 0
        %772 = vmatprep.subr.bf16.mxu0 0
        %773 = vmatpush1.bf16.xpose.msra.mxu0 0
        %774 = vmatprep.subr.bf16.mxu0 0
        %775 = vmatpush1.bf16.xpose.msra.mxu0 0
        %776 = vmatprep.subr.bf16.mxu0 0
        %777 = vmatpush1.bf16.xpose.msra.mxu0 0
        %778 = vmatprep.subr.bf16.mxu0 0
        %779 = vmatpush1.bf16.xpose.msra.mxu0 0
        %780 = vmatprep.subr.bf16.mxu0 0
        %781 = vmatpush1.bf16.xpose.msra.mxu0 0
        %782 = vmatprep.subr.bf16.mxu0 0
        %783 = vmatpush1.bf16.xpose.msra.mxu0 0
        %784 = vmatprep.subr.bf16.mxu0 0
        %785 = vmatpush1.bf16.xpose.msra.mxu0 0
        %786 = vmatprep.subr.bf16.mxu0 0
        %787 = vmatpush1.bf16.xpose.msra.mxu0 0
        %788 = vmatprep.mubr.bf16.mxu0 0
        %789 = vmatmul.mubr.bf16.gmra.mrb[0].mxu0 %v751
        %v790 = vpop.f32.mrb[0].mxu0
        %v791 = vadd.f32 0.0, %v790
        %v792 = vpop.f32.mrb[0].mxu0
        %v793 = vpop.f32.mrb[0].mxu0
        %v794 = vpop.f32.mrb[0].mxu0
        %795 = vdwg.mxu0
        %vm796 = vcmask 64512
        %v797 = vsel %vm796, %v745, -inf
        %798 = vmax.xlane.f32.xlu0 %v797
        %v799 = vpop.xlane.xlu0 %798
        %v800 = vsel %vm796, %v791, -inf
        %801 = vmax.xlane.f32.xlu0 %v800
        %v802 = vpop.xlane.xlu0 %801
        %v803 = vsub.f32 %v745, %v799
        %v804 = vsub.f32 %v791, %v802
        %v805 = vmul.f32 %v803, 1.442695
        %v806 = vpow.pop %v805
        %v807 = vmul.f32 %v804, 1.442695
        %v808 = vpow.pop %v807
        %v809 = vsel %vm796, %v806, 0.0
        %810 = vadd.xlane.f32.xlu0 %v809
        %v811 = vpop.xlane.xlu0 %810
        %v812 = vsel %vm796, %v808, 0.0
        %813 = vadd.xlane.f32.xlu0 %v812
        %v814 = vpop.xlane.xlu0 %813
        %v815 = vrcp.pop %v811
        %v816 = vmul.f32 %v806, %v815
        %v817 = vrcp.pop %v814
        %v818 = vmul.f32 %v808, %v817
        %v819 = vpack.c.bf16 %v816, %v816
        %v820 = vpack.c.bf16 %v818, %v818
        %v822 = vsel %vm796, %v819, 0
        %vm824 = vcmask 1043456
        %v826 = vsel %vm824, %v701, 0
        %828 = vmatprep.subr.bf16.mxu0 0
        %829 = vmatpush1.bf16.msra.mxu0 %v826
        %830 = vmatprep.subr.bf16.mxu0 0
        %831 = vmatpush1.bf16.msra.mxu0 0
        %832 = vmatprep.subr.bf16.mxu0 0
        %833 = vmatpush1.bf16.msra.mxu0 0
        %834 = vmatprep.subr.bf16.mxu0 0
        %835 = vmatpush1.bf16.msra.mxu0 0
        %836 = vmatprep.subr.bf16.mxu0 0
        %837 = vmatpush1.bf16.msra.mxu0 0
        %838 = vmatprep.subr.bf16.mxu0 0
        %839 = vmatpush1.bf16.msra.mxu0 0
        %840 = vmatprep.subr.bf16.mxu0 0
        %841 = vmatpush1.bf16.msra.mxu0 0
        %842 = vmatprep.subr.bf16.mxu0 0
        %843 = vmatpush1.bf16.msra.mxu0 0
        %844 = vmatprep.subr.bf16.mxu0 0
        %845 = vmatpush1.bf16.msra.mxu0 0
        %846 = vmatprep.subr.bf16.mxu0 0
        %847 = vmatpush1.bf16.msra.mxu0 0
        %848 = vmatprep.subr.bf16.mxu0 0
        %849 = vmatpush1.bf16.msra.mxu0 0
        %850 = vmatprep.subr.bf16.mxu0 0
        %851 = vmatpush1.bf16.msra.mxu0 0
        %852 = vmatprep.subr.bf16.mxu0 0
        %853 = vmatpush1.bf16.msra.mxu0 0
        %854 = vmatprep.subr.bf16.mxu0 0
        %855 = vmatpush1.bf16.msra.mxu0 0
        %856 = vmatprep.subr.bf16.mxu0 0
        %857 = vmatpush1.bf16.msra.mxu0 0
        %858 = vmatprep.subr.bf16.mxu0 0
        %859 = vmatpush1.bf16.msra.mxu0 0
        %860 = vmatprep.mubr.bf16.mxu0 0
        %861 = vmatmul.mubr.bf16.gmra.mrb[0].mxu0 %v822
        %v862 = vpop.f32.mrb[0].mxu0
        %v863 = vadd.f32 0.0, %v862
        %v864 = vpop.f32.mrb[0].mxu0
        %v865 = vpop.f32.mrb[0].mxu0
        %v866 = vpop.f32.mrb[0].mxu0
        %867 = vdwg.mxu0
        %v869 = vsel %vm796, %v820, 0
        %v872 = vsel %vm824, %v702, 0
        %874 = vmatprep.subr.bf16.mxu0 0
        %875 = vmatpush1.bf16.msra.mxu0 %v872
        %876 = vmatprep.subr.bf16.mxu0 0
        %877 = vmatpush1.bf16.msra.mxu0 0
        %878 = vmatprep.subr.bf16.mxu0 0
        %879 = vmatpush1.bf16.msra.mxu0 0
        %880 = vmatprep.subr.bf16.mxu0 0
        %881 = vmatpush1.bf16.msra.mxu0 0
        %882 = vmatprep.subr.bf16.mxu0 0
        %883 = vmatpush1.bf16.msra.mxu0 0
        %884 = vmatprep.subr.bf16.mxu0 0
        %885 = vmatpush1.bf16.msra.mxu0 0
        %886 = vmatprep.subr.bf16.mxu0 0
        %887 = vmatpush1.bf16.msra.mxu0 0
        %888 = vmatprep.subr.bf16.mxu0 0
        %889 = vmatpush1.bf16.msra.mxu0 0
        %890 = vmatprep.subr.bf16.mxu0 0
        %891 = vmatpush1.bf16.msra.mxu0 0
        %892 = vmatprep.subr.bf16.mxu0 0
        %893 = vmatpush1.bf16.msra.mxu0 0
        %894 = vmatprep.subr.bf16.mxu0 0
        %895 = vmatpush1.bf16.msra.mxu0 0
        %896 = vmatprep.subr.bf16.mxu0 0
        %897 = vmatpush1.bf16.msra.mxu0 0
        %898 = vmatprep.subr.bf16.mxu0 0
        %899 = vmatpush1.bf16.msra.mxu0 0
        %900 = vmatprep.subr.bf16.mxu0 0
        %901 = vmatpush1.bf16.msra.mxu0 0
        %902 = vmatprep.subr.bf16.mxu0 0
        %903 = vmatpush1.bf16.msra.mxu0 0
        %904 = vmatprep.subr.bf16.mxu0 0
        %905 = vmatpush1.bf16.msra.mxu0 0
        %906 = vmatprep.mubr.bf16.mxu0 0
        %907 = vmatmul.mubr.bf16.gmra.mrb[0].mxu0 %v869
        %v908 = vpop.f32.mrb[0].mxu0
        %v909 = vadd.f32 0.0, %v908
        %v910 = vpop.f32.mrb[0].mxu0
        %v911 = vpop.f32.mrb[0].mxu0
        %v912 = vpop.f32.mrb[0].mxu0
        %913 = vdwg.mxu0
        %v914 = vpack.c.bf16 %v909, %v863
        %v915 = vld [vmem:[%s496] sm:$0xf]
        %v916 = vld [vmem:[%s496 + $0x4] sm:$0xf]
        %v917 = vld [vmem:[%s496 + $0x8] sm:$0xf]
        %v918 = vld [vmem:[%s496 + $0xc] sm:$0xf]
        %v923 = vunpack.c.l.b16 %v915
        %v924 = vunpack.c.l.b16 %v916
        %v925 = vunpack.c.l.b16 %v917
        %v926 = vunpack.c.l.b16 %v918
        %v927 = vpack.c.b16 %v924, %v923
        %v928 = vpack.c.b16 %v926, %v925
        %v932 = vsel %vm538, %v914, 0
        %934 = vmatprep.subr.bf16.mxu0 0
        %935 = vmatpush1.bf16.msra.mxu0 %v927
        %936 = vmatprep.subr.bf16.mxu0 0
        %937 = vmatpush1.bf16.msra.mxu0 %v928
        %938 = vmatprep.subr.bf16.mxu0 0
        %939 = vmatpush1.bf16.msra.mxu0 0
        %940 = vmatprep.subr.bf16.mxu0 0
        %941 = vmatpush1.bf16.msra.mxu0 0
        %942 = vmatprep.subr.bf16.mxu0 0
        %943 = vmatpush1.bf16.msra.mxu0 0
        %944 = vmatprep.subr.bf16.mxu0 0
        %945 = vmatpush1.bf16.msra.mxu0 0
        %946 = vmatprep.subr.bf16.mxu0 0
        %947 = vmatpush1.bf16.msra.mxu0 0
        %948 = vmatprep.subr.bf16.mxu0 0
        %949 = vmatpush1.bf16.msra.mxu0 0
        %950 = vmatprep.subr.bf16.mxu0 0
        %951 = vmatpush1.bf16.msra.mxu0 0
        %952 = vmatprep.subr.bf16.mxu0 0
        %953 = vmatpush1.bf16.msra.mxu0 0
        %954 = vmatprep.subr.bf16.mxu0 0
        %955 = vmatpush1.bf16.msra.mxu0 0
        %956 = vmatprep.subr.bf16.mxu0 0
        %957 = vmatpush1.bf16.msra.mxu0 0
        %958 = vmatprep.subr.bf16.mxu0 0
        %959 = vmatpush1.bf16.msra.mxu0 0
        %960 = vmatprep.subr.bf16.mxu0 0
        %961 = vmatpush1.bf16.msra.mxu0 0
        %962 = vmatprep.subr.bf16.mxu0 0
        %963 = vmatpush1.bf16.msra.mxu0 0
        %964 = vmatprep.subr.bf16.mxu0 0
        %965 = vmatpush1.bf16.msra.mxu0 0
        %966 = vmatprep.mubr.bf16.mxu0 0
        %967 = vmatmul.mubr.bf16.gmra.mrb[0].mxu0 %v932
        %v968 = vpop.f32.mrb[0].mxu0
        %v969 = vadd.f32 0.0, %v968
        %v970 = vpop.f32.mrb[0].mxu0
        %v971 = vpop.f32.mrb[0].mxu0
        %v972 = vadd.f32 0.0, %v971
        %v973 = vpop.f32.mrb[0].mxu0
        %974 = vdwg.mxu0
        %v975 = vadd.f32 %v519, %v969
        %v976 = vadd.f32 %v520, %v972
        %v977 = vpack.c.bf16 %v976, %v975
        %v978 = vld [vmem:[%s501] sm:$0xf]
        %v979 = vld [vmem:[%s501 + $0x4] sm:$0xf]
        %v980 = vld [vmem:[%s501 + $0x8] sm:$0xf]
        %v981 = vld [vmem:[%s501 + $0xc] sm:$0xf]
        %v982 = vld [vmem:[%s504] sm:$0x1]
        %v984 = vlaneseq
        %v985 = vshrl.u32 %v984, 7
        %v986 = vsub.s32 0, %v985
        %v987 = vrot.slane %v982, %v986
        %v993 = vunpack.c.l.b16 %v978
        %v994 = vunpack.c.l.b16 %v979
        %v995 = vunpack.c.l.b16 %v980
        %v996 = vunpack.c.l.b16 %v981
        %v997 = vpack.c.b16 %v994, %v993
        %v998 = vpack.c.b16 %v996, %v995
        %v1002 = vsel %vm538, %v977, 0
        %1004 = vmatprep.subr.bf16.mxu0 0
        %1005 = vmatpush1.bf16.msra.mxu0 %v997
        %1006 = vmatprep.subr.bf16.mxu0 0
        %1007 = vmatpush1.bf16.msra.mxu0 %v998
        %1008 = vmatprep.subr.bf16.mxu0 0
        %1009 = vmatpush1.bf16.msra.mxu0 0
        %1010 = vmatprep.subr.bf16.mxu0 0
        %1011 = vmatpush1.bf16.msra.mxu0 0
        %1012 = vmatprep.subr.bf16.mxu0 0
        %1013 = vmatpush1.bf16.msra.mxu0 0
        %1014 = vmatprep.subr.bf16.mxu0 0
        %1015 = vmatpush1.bf16.msra.mxu0 0
        %1016 = vmatprep.subr.bf16.mxu0 0
        %1017 = vmatpush1.bf16.msra.mxu0 0
        %1018 = vmatprep.subr.bf16.mxu0 0
        %1019 = vmatpush1.bf16.msra.mxu0 0
        %1020 = vmatprep.subr.bf16.mxu0 0
        %1021 = vmatpush1.bf16.msra.mxu0 0
        %1022 = vmatprep.subr.bf16.mxu0 0
        %1023 = vmatpush1.bf16.msra.mxu0 0
        %1024 = vmatprep.subr.bf16.mxu0 0
        %1025 = vmatpush1.bf16.msra.mxu0 0
        %1026 = vmatprep.subr.bf16.mxu0 0
        %1027 = vmatpush1.bf16.msra.mxu0 0
        %1028 = vmatprep.subr.bf16.mxu0 0
        %1029 = vmatpush1.bf16.msra.mxu0 0
        %1030 = vmatprep.subr.bf16.mxu0 0
        %1031 = vmatpush1.bf16.msra.mxu0 0
        %1032 = vmatprep.subr.bf16.mxu0 0
        %1033 = vmatpush1.bf16.msra.mxu0 0
        %1034 = vmatprep.subr.bf16.mxu0 0
        %1035 = vmatpush1.bf16.msra.mxu0 0
        %1036 = vmatprep.mubr.bf16.mxu0 0
        %1037 = vmatmul.mubr.bf16.gmra.mrb[0].mxu0 %v1002
        %v1038 = vpop.f32.mrb[0].mxu0
        %v1039 = vadd.f32 %v987, %v1038
        %v1040 = vpop.f32.mrb[0].mxu0
        %v1041 = vpop.f32.mrb[0].mxu0
        %v1042 = vadd.f32 %v987, %v1041
        %v1043 = vpop.f32.mrb[0].mxu0
        %1044 = vdwg.mxu0
        %v1045 = vmax.f32 %v1039, 0.0
        %v1046 = vmax.f32 %v1042, 0.0
        %v1047 = vpack.c.bf16 %v1046, %v1045
        %v1048 = vld [vmem:[%s415] sm:$0xf]
        %v1049 = vld [vmem:[%s415 + $0x4] sm:$0xf]
        %v1050 = vld [vmem:[%s415 + $0x8] sm:$0xf]
        %v1051 = vld [vmem:[%s415 + $0xc] sm:$0xf]
        %v1056 = vunpack.c.l.b16 %v1048
        %v1057 = vunpack.c.l.b16 %v1049
        %v1058 = vunpack.c.l.b16 %v1050
        %v1059 = vunpack.c.l.b16 %v1051
        %v1060 = vpack.c.b16 %v1057, %v1056
        %v1061 = vpack.c.b16 %v1059, %v1058
        %v1065 = vsel %vm538, %v1047, 0
        %1067 = vmatprep.subr.bf16.mxu0 0
        %1068 = vmatpush1.bf16.msra.mxu0 %v1060
        %1069 = vmatprep.subr.bf16.mxu0 0
        %1070 = vmatpush1.bf16.msra.mxu0 %v1061
        %1071 = vmatprep.subr.bf16.mxu0 0
        %1072 = vmatpush1.bf16.msra.mxu0 0
        %1073 = vmatprep.subr.bf16.mxu0 0
        %1074 = vmatpush1.bf16.msra.mxu0 0
        %1075 = vmatprep.subr.bf16.mxu0 0
        %1076 = vmatpush1.bf16.msra.mxu0 0
        %1077 = vmatprep.subr.bf16.mxu0 0
        %1078 = vmatpush1.bf16.msra.mxu0 0
        %1079 = vmatprep.subr.bf16.mxu0 0
        %1080 = vmatpush1.bf16.msra.mxu0 0
        %1081 = vmatprep.subr.bf16.mxu0 0
        %1082 = vmatpush1.bf16.msra.mxu0 0
        %1083 = vmatprep.subr.bf16.mxu0 0
        %1084 = vmatpush1.bf16.msra.mxu0 0
        %1085 = vmatprep.subr.bf16.mxu0 0
        %1086 = vmatpush1.bf16.msra.mxu0 0
        %1087 = vmatprep.subr.bf16.mxu0 0
        %1088 = vmatpush1.bf16.msra.mxu0 0
        %1089 = vmatprep.subr.bf16.mxu0 0
        %1090 = vmatpush1.bf16.msra.mxu0 0
        %1091 = vmatprep.subr.bf16.mxu0 0
        %1092 = vmatpush1.bf16.msra.mxu0 0
        %1093 = vmatprep.subr.bf16.mxu0 0
        %1094 = vmatpush1.bf16.msra.mxu0 0
        %1095 = vmatprep.subr.bf16.mxu0 0
        %1096 = vmatpush1.bf16.msra.mxu0 0
        %1097 = vmatprep.subr.bf16.mxu0 0
        %1098 = vmatpush1.bf16.msra.mxu0 0
        %1099 = vmatprep.mubr.bf16.mxu0 0
        %1100 = vmatmul.mubr.bf16.gmra.mrb[0].mxu0 %v1065
        %v1101 = vpop.f32.mrb[0].mxu0
        %v1102 = vadd.f32 0.0, %v1101
        %v1103 = vpop.f32.mrb[0].mxu0
        %v1104 = vpop.f32.mrb[0].mxu0
        %v1105 = vadd.f32 0.0, %v1104
        %v1106 = vpop.f32.mrb[0].mxu0
        %1107 = vdwg.mxu0
        %v1108 = vadd.f32 %v975, %v1102
        %v1109 = vadd.f32 %v976, %v1105
        %v1110 = vld [vmem:[%s507] sm:$0x1]
        %v1112 = vlaneseq
        %v1113 = vshrl.u32 %v1112, 7
        %v1114 = vsub.s32 0, %v1113
        %v1115 = vrot.slane %v1110, %v1114
        %v1117 = vadd.f32 %v1108, %v1115
        %v1118 = vadd.f32 %v1109, %v1115
        %1119 = vst.msk [vmem:[#allocation7] sm:$0xff] %vm538, %v1117
        %1120 = vst.msk [vmem:[#allocation7 + $0x8] sm:$0xff] %vm538, %v1118
        // Predicated region
        $region69: #{tpu_custom_call.1} parent=55 // pred_check
          %p1121 = pneg %p289
        $region70: #{tpu_custom_call.1} parent=55 // pred_check_branch
          %1123 = sbr.rel (%p1121) target = $region72
        $region71: #{tpu_custom_call.1} parent=55 // pred_region
          %s1124 = smul.u32 2, %s29
          %s1126 = ssub.s32 256, 256
          %1127 = vsyncadd [#allocation4], %s1126
          %s1128 = smul.addr %s1124, 128
          %s1129 = scalar_lea.hbm %s9, %s1128
          %s1130 = sshll.u32 [#allocation7], 4
          %s1131 = int_to_ptr.vmem [resolvable:$true] %s1130
          %1136 = dma.vmem_to_hbm [thread:$0]  %s1131, 256, %s1129, [#allocation4], 128, 128, 8
        $region72: #{tpu_custom_call.1} parent=55 // pred_fallthru
          _
        // Predicated region
        $region73: #{tpu_custom_call.1} parent=55 // pred_check
          %p1137 = pneg %p289
        $region74: #{tpu_custom_call.1} parent=55 // pred_check_branch
          %1139 = sbr.rel (%p1137) target = $region76
        $region75: #{tpu_custom_call.1} parent=55 // pred_region
          %1140 = dma.done [#allocation4], 256
        $region76: #{tpu_custom_call.1} parent=55 // pred_fallthru
          _
      $region56: #{tpu_custom_call.1} parent=5 // pred_fallthru
        _
      %p1141 = scmp.le.s32.totalorder 2, %s20
      // Predicated region
      $region77: #{tpu_custom_call.1} parent=5 // pred_check
        %p1142 = pneg %p1141
      $region78: #{tpu_custom_call.1} parent=5 // pred_check_branch
        %1144 = sbr.rel (%p1142) target = $region80
      $region79: #{tpu_custom_call.1} parent=5 // pred_region
        %s1145 = ssub.s32 %s20, 2
      $region80: #{tpu_custom_call.1} parent=5 // pred_fallthru
        _
    $region6: #{tpu_custom_call.1} parent=1 // loop_footer
      %s24 = sadd.s32 1, %s20
    $region7: #{tpu_custom_call.1} parent=1 // loop_footer_branch
      %19 = sbr.rel target = $region3
    $region8: #{tpu_custom_call.1} parent=1 // loop_exit
      _
    %1146 = vsyncpa [#allocation3], 1
    %s1147 = scalar_lea.sflag [#allocation3], 1
    %1148 = vsyncpa %s1147, 1
    %1149 = vsyncpa [#allocation6], 1
    %s1150 = scalar_lea.sflag [#allocation6], 1
    %1151 = vsyncpa %s1150, 1
    %1152 = vsyncpa [#allocation4], 1
    %s1153 = scalar_lea.sflag [#allocation4], 1
    %1154 = vsyncpa %s1153, 1

</llo_original>
